<compile_context>
chip_gen: v6e
topology: v6e:2x2x1
jax: 0.10.0
libtpu: 0.0.40
codegen_flags: <defaults>
</compile_context>

<pallas_src>
import jax
import jax.numpy as jnp
from jax.experimental import pallas as pl
from jax.experimental.pallas import tpu as pltpu

# RGB -> YUV matrix from the PyTorch module (column c -> output channel c).
_M = ((0.2989, -0.1688, 0.5),
      (0.5866, -0.3312, -0.4184),
      (0.1145, 0.5, -0.0816))
# Per-output-channel rescaling applied after the matmul in the module.
_SCALE = (219.0 / 255.0, 224.0 / 255.0, 224.0 / 255.0)
_OFFSET = (16.0 / 255.0, 128.0 / 255.0, 128.0 / 255.0)
# Fold the scale into the matrix columns -> one FMA chain per output channel.
_MF = tuple(tuple(_M[k][c] * _SCALE[c] for c in range(3)) for k in range(3))

_LANES = 128
_SUBLANES = 8
# 1024 rows x 128 lanes x 3 ch x 4 B = 1.5 MiB per block (x4 for in/out
# double-buffering = 6 MiB: fits the 16 MiB v5e scoped-VMEM default easily).
_MAX_ROWS_PER_TILE = 1024
_SMALL_BLOCK_BUDGET_BYTES = 2 << 20   # per-array budget when folding batch


def rgb2yuv_kernel(x_ref, o_ref):
    """x_ref / o_ref: (BN, 3, TS, 128) blocks; pixels dense on (sublane, lane)."""
    r = x_ref[:, 0, :, :]
    g = x_ref[:, 1, :, :]
    b = x_ref[:, 2, :, :]
    o_ref[:, 0, :, :] = _MF[0][0] * r + _MF[1][0] * g + _MF[2][0] * b + _OFFSET[0]
    o_ref[:, 1, :, :] = _MF[0][1] * r + _MF[1][1] * g + _MF[2][1] * b + _OFFSET[1]
    o_ref[:, 2, :, :] = _MF[0][2] * r + _MF[1][2] * g + _MF[2][2] * b + _OFFSET[2]


def _row_tiling(p):
    """Return (rows_per_tile, rows_padded) for a flat pixel count p."""
    rows = -(-p // _LANES)                       # ceil(p / 128)
    if rows <= _MAX_ROWS_PER_TILE:
        ts = -(-rows // _SUBLANES) * _SUBLANES   # one sublane-aligned tile
        ts = max(ts, _SUBLANES)
    else:
        ts = _MAX_ROWS_PER_TILE
    rows_padded = -(-rows // ts) * ts
    return ts, rows_padded


def rgb2yuv(x_nchw):
    """RGB2YUV.forward.  Input/output: float32 NCHW with C == 3."""
    n, c, h, w = x_nchw.shape
    assert c == 3, c
    p = h * w
    ts, rows_padded = _row_tiling(p)
    p_pad = rows_padded * _LANES

    x2 = x_nchw.reshape(n, 3, p)                 # metadata-only reshape
    if p_pad != p:
        x2 = jnp.pad(x2, ((0, 0), (0, 0), (0, p_pad - p)))
    x4 = x2.reshape(n, 3, rows_padded, _LANES)   # pixels -> (sublane, lane)

    # Fold batch into the block when the pixel axis fits in a single tile,
    # so small images still move a reasonable amount of data per grid step.
    bn = 1
    if rows_padded == ts:
        per_batch_bytes = 3 * rows_padded * _LANES * 4
        bn = max(1, min(n, _SMALL_BLOCK_BUDGET_BYTES // per_batch_bytes))
        while n % bn != 0:
            bn -= 1

    grid = (n // bn, rows_padded // ts)
    spec = pl.BlockSpec((bn, 3, ts, _LANES), lambda i, j: (i, 0, j, 0))

    out4 = pl.pallas_call(
        rgb2yuv_kernel,
        out_shape=jax.ShapeDtypeStruct((n, 3, rows_padded, _LANES), jnp.float32),
        grid_spec=pltpu.PrefetchScalarGridSpec(
            num_scalar_prefetch=0,
            grid=grid,
            in_specs=[spec],
            out_specs=spec),
        compiler_params=pltpu.CompilerParams(
            dimension_semantics=("parallel", "parallel")),
    )(x4)

    out2 = out4.reshape(n, 3, p_pad)
    if p_pad != p:
        out2 = out2[:, :, :p]
    return out2.reshape(n, 3, h, w)


def reference_rgb2yuv(x_nchw):
    """Pure-JAX transcription of the PyTorch forward, for correctness check."""
    m = jnp.array(_M, jnp.float32)
    rgb = jnp.transpose(x_nchw, (0, 2, 3, 1))
    yuv = jnp.matmul(rgb, m, precision=jax.lax.Precision.HIGHEST)
    y = (yuv[..., 0] * 219.0 + 16.0) / 255.0
    u = (yuv[..., 1] * 224.0 + 128.0) / 255.0
    v = (yuv[..., 2] * 224.0 + 128.0) / 255.0
    return jnp.transpose(jnp.stack([y, u, v], axis=-1), (0, 3, 1, 2))


if __name__ == "__main__":
    key = jax.random.PRNGKey(0)
    # float32 RGB in [0, 1], NCHW, as the module expects.
    x = jax.random.uniform(key, (2, 3, 16, 16), dtype=jnp.float32)

    out = jax.block_until_ready(rgb2yuv(x))
    ref = reference_rgb2yuv(x)

    assert out.shape == (2, 3, 16, 16), out.shape
    assert jnp.allclose(out, ref, rtol=1e-5, atol=1e-5), (
        "mismatch vs JAX reference: max abs err "
        f"{float(jnp.max(jnp.abs(out - ref)))}")

    print("KERNEL_OK")
</pallas_src>

<mosaic_0001>
module attributes {stable_mosaic.version = 11 : i64} {
  func.func @rgb2yuv_kernel(%arg0: i32, %arg1: i32, %arg2: memref<2x3x8x128xf32, #tpu.memory_space<vmem>>, %arg3: memref<2x3x8x128xf32, #tpu.memory_space<vmem>>) attributes {dimension_semantics = [#tpu.dimension_semantics<parallel>, #tpu.dimension_semantics<parallel>], iteration_bounds = array<i64: 1, 1>, scalar_prefetch = 0 : i64, scratch_operands = 0 : i64, tpu.core_type = #tpu.core_type<tc>, window_params = [{transform_indices = @transform_0, window_bounds = array<i64: 2, 3, 8, 128>}, {transform_indices = @transform_1, window_bounds = array<i64: 2, 3, 8, 128>}]} {
    %c0 = arith.constant 0 : index
    %c0_0 = arith.constant 0 : index
    %c0_1 = arith.constant 0 : index
    %c0_2 = arith.constant 0 : index
    %0 = vector.load %arg2[%c0, %c0_0, %c0_1, %c0_2] : memref<2x3x8x128xf32, #tpu.memory_space<vmem>>, vector<2x1x8x128xf32>
    %1 = vector.shape_cast %0 : vector<2x1x8x128xf32> to vector<2x8x128xf32>
    %c0_3 = arith.constant 0 : index
    %c1 = arith.constant 1 : index
    %c0_4 = arith.constant 0 : index
    %c0_5 = arith.constant 0 : index
    %2 = vector.load %arg2[%c0_3, %c1, %c0_4, %c0_5] : memref<2x3x8x128xf32, #tpu.memory_space<vmem>>, vector<2x1x8x128xf32>
    %3 = vector.shape_cast %2 : vector<2x1x8x128xf32> to vector<2x8x128xf32>
    %c0_6 = arith.constant 0 : index
    %c2 = arith.constant 2 : index
    %c0_7 = arith.constant 0 : index
    %c0_8 = arith.constant 0 : index
    %4 = vector.load %arg2[%c0_6, %c2, %c0_7, %c0_8] : memref<2x3x8x128xf32, #tpu.memory_space<vmem>>, vector<2x1x8x128xf32>
    %5 = vector.shape_cast %4 : vector<2x1x8x128xf32> to vector<2x8x128xf32>
    %cst = arith.constant 0.256702363 : f32
    %6 = vector.broadcast %cst : f32 to vector<2x8x128xf32>
    %7 = arith.mulf %6, %1 : vector<2x8x128xf32>
    %cst_9 = arith.constant 0.503785908 : f32
    %8 = vector.broadcast %cst_9 : f32 to vector<2x8x128xf32>
    %9 = arith.mulf %8, %3 : vector<2x8x128xf32>
    %10 = arith.addf %7, %9 : vector<2x8x128xf32>
    %cst_10 = arith.constant 0.0983352959 : f32
    %11 = vector.broadcast %cst_10 : f32 to vector<2x8x128xf32>
    %12 = arith.mulf %11, %5 : vector<2x8x128xf32>
    %13 = arith.addf %10, %12 : vector<2x8x128xf32>
    %cst_11 = arith.constant 6.274510e-02 : f32
    %14 = vector.broadcast %cst_11 : f32 to vector<2x8x128xf32>
    %15 = arith.addf %13, %14 : vector<2x8x128xf32>
    %c0_12 = arith.constant 0 : index
    %c0_13 = arith.constant 0 : index
    %c0_14 = arith.constant 0 : index
    %c0_15 = arith.constant 0 : index
    %16 = vector.load %arg3[%c0_12, %c0_13, %c0_14, %c0_15] : memref<2x3x8x128xf32, #tpu.memory_space<vmem>>, vector<2x1x8x128xf32>
    %17 = vector.shape_cast %16 : vector<2x1x8x128xf32> to vector<2x8x128xf32>
    %18 = vector.shape_cast %15 : vector<2x8x128xf32> to vector<2x1x8x128xf32>
    tpu.vector_store %arg3[%c0_12, %c0_13, %c0_14, %c0_15], %18 {strides = array<i32>} : memref<2x3x8x128xf32, #tpu.memory_space<vmem>>, vector<2x1x8x128xf32>,
    %cst_16 = arith.constant -0.14827922 : f32
    %19 = vector.broadcast %cst_16 : f32 to vector<2x8x128xf32>
    %20 = arith.mulf %19, %1 : vector<2x8x128xf32>
    %cst_17 = arith.constant -0.29093647 : f32
    %21 = vector.broadcast %cst_17 : f32 to vector<2x8x128xf32>
    %22 = arith.mulf %21, %3 : vector<2x8x128xf32>
    %23 = arith.addf %20, %22 : vector<2x8x128xf32>
    %cst_18 = arith.constant 0.43921569 : f32
    %24 = vector.broadcast %cst_18 : f32 to vector<2x8x128xf32>
    %25 = arith.mulf %24, %5 : vector<2x8x128xf32>
    %26 = arith.addf %23, %25 : vector<2x8x128xf32>
    %cst_19 = arith.constant 0.501960814 : f32
    %27 = vector.broadcast %cst_19 : f32 to vector<2x8x128xf32>
    %28 = arith.addf %26, %27 : vector<2x8x128xf32>
    %c0_20 = arith.constant 0 : index
    %c1_21 = arith.constant 1 : index
    %c0_22 = arith.constant 0 : index
    %c0_23 = arith.constant 0 : index
    %29 = vector.load %arg3[%c0_20, %c1_21, %c0_22, %c0_23] : memref<2x3x8x128xf32, #tpu.memory_space<vmem>>, vector<2x1x8x128xf32>
    %30 = vector.shape_cast %29 : vector<2x1x8x128xf32> to vector<2x8x128xf32>
    %31 = vector.shape_cast %28 : vector<2x8x128xf32> to vector<2x1x8x128xf32>
    tpu.vector_store %arg3[%c0_20, %c1_21, %c0_22, %c0_23], %31 {strides = array<i32>} : memref<2x3x8x128xf32, #tpu.memory_space<vmem>>, vector<2x1x8x128xf32>,
    %cst_24 = arith.constant 0.43921569 : f32
    %32 = vector.broadcast %cst_24 : f32 to vector<2x8x128xf32>
    %33 = arith.mulf %32, %1 : vector<2x8x128xf32>
    %cst_25 = arith.constant -0.367535681 : f32
    %34 = vector.broadcast %cst_25 : f32 to vector<2x8x128xf32>
    %35 = arith.mulf %34, %3 : vector<2x8x128xf32>
    %36 = arith.addf %33, %35 : vector<2x8x128xf32>
    %cst_26 = arith.constant -7.168000e-02 : f32
    %37 = vector.broadcast %cst_26 : f32 to vector<2x8x128xf32>
    %38 = arith.mulf %37, %5 : vector<2x8x128xf32>
    %39 = arith.addf %36, %38 : vector<2x8x128xf32>
    %cst_27 = arith.constant 0.501960814 : f32
    %40 = vector.broadcast %cst_27 : f32 to vector<2x8x128xf32>
    %41 = arith.addf %39, %40 : vector<2x8x128xf32>
    %c0_28 = arith.constant 0 : index
    %c2_29 = arith.constant 2 : index
    %c0_30 = arith.constant 0 : index
    %c0_31 = arith.constant 0 : index
    %42 = vector.load %arg3[%c0_28, %c2_29, %c0_30, %c0_31] : memref<2x3x8x128xf32, #tpu.memory_space<vmem>>, vector<2x1x8x128xf32>
    %43 = vector.shape_cast %42 : vector<2x1x8x128xf32> to vector<2x8x128xf32>
    %44 = vector.shape_cast %41 : vector<2x8x128xf32> to vector<2x1x8x128xf32>
    tpu.vector_store %arg3[%c0_28, %c2_29, %c0_30, %c0_31], %44 {strides = array<i32>} : memref<2x3x8x128xf32, #tpu.memory_space<vmem>>, vector<2x1x8x128xf32>,
    return
  }
  func.func @transform_0(%arg0: i32, %arg1: i32) -> (i32, i32, i32, i32) {
    %c0_i32 = arith.constant 0 : i32
    %c0_i32_0 = arith.constant 0 : i32
    %c0_i32_1 = arith.constant 0 : i32
    return %arg0, %c0_i32, %arg1, %c0_i32_0 : i32, i32, i32, i32
  }
  func.func @transform_1(%arg0: i32, %arg1: i32) -> (i32, i32, i32, i32) {
    %c0_i32 = arith.constant 0 : i32
    %c0_i32_0 = arith.constant 0 : i32
    %c0_i32_1 = arith.constant 0 : i32
    return %arg0, %c0_i32, %arg1, %c0_i32_0 : i32, i32, i32, i32
  }
}

</mosaic_0001>

<llo_original>
// kernel: tpu_custom_call.1
$region0: #{tpu_custom_call.1}
  #allocation0 [shape = 'u32[]', space=smem, size = 0x4, offset = 0x4, fixed_abs, tag = 'smem constant byte address 0x4 - core index']
  #allocation1 [shape = 'u32[144,128]{1,0:T(1,128)}', space=vmem, size = 0x12000, scoped, tag = 'internal scratch']
  %s0 = inlined_call_operand.hbm [shape: f32[2,3,8,128], index: 0, kind: input, shape index: {}]
  %s1 = inlined_call_operand.hbm [shape: f32[2,3,8,128], index: 1, kind: output, shape index: {}]
  %s2 = sld [smem:[#allocation0]]
  $region18: #{tpu_custom_call.1} parent=0
    _
  %s4 = ssub.s32 1, %s2
  %s5 = scalar_select 0, %s4, %s2
  $region1: #{tpu_custom_call.1} parent=0
    #allocation2 [shape = 'u8[24576]{0}', space=vmem, size = 0x6000, scoped, tag = 'input window, operand 0, single buffered']
    #allocation3 [shape = 's32[1]{0}', space=sflag, size = 0x4, scoped, tag = 'scoped memory for tpu_custom_call.1']
    #allocation4 [shape = 's32[1]{0}', space=sflag, size = 0x4, scoped, tag = 'scoped memory for tpu_custom_call.1']
    #allocation5 [shape = 'u8[24576]{0}', space=vmem, size = 0x6000, scoped, tag = 'output window, operand 0, single buffered']
    %6 = vsyncpa [#allocation3], 0
    %7 = vsyncpa [#allocation4], 0
    // Predicated region
    $region2: #{tpu_custom_call.1} parent=1 // pred_check
      _
    $region3: #{tpu_custom_call.1} parent=1 // pred_check_branch
      %9 = sbr.rel (0) target = $region5
    $region4: #{tpu_custom_call.1} parent=1 // pred_region
      %s11 = ssub.s32 768, 768
      %12 = vsyncadd [#allocation3], %s11
      %s13 = sshll.u32 [#allocation2], 4
      %s14 = int_to_ptr.vmem [resolvable:$true] %s13
      %19 = dma.hbm_to_vmem [thread:$0]  %s0, 768, %s14, [#allocation3], 128, 128, 8
    $region5: #{tpu_custom_call.1} parent=1 // pred_fallthru
      _
    // Predicated region
    $region6: #{tpu_custom_call.1} parent=1 // pred_check
      _
    $region7: #{tpu_custom_call.1} parent=1 // pred_check_branch
      %21 = sbr.rel (0) target = $region9
    $region8: #{tpu_custom_call.1} parent=1 // pred_region
      %22 = dma.done [#allocation3], 768
    $region9: #{tpu_custom_call.1} parent=1 // pred_fallthru
      _
    %v23 = vld [vmem:[#allocation2] sm:$0xff]
    %v24 = vld [vmem:[#allocation2 + $0x18] sm:$0xff]
    %s25 = scalar_lea.vmem [#allocation2], 8
    %v26 = vld [vmem:[%s25] sm:$0xff]
    %v27 = vld [vmem:[%s25 + $0x18] sm:$0xff]
    %s28 = scalar_lea.vmem [#allocation2], 16
    %v29 = vld [vmem:[%s28] sm:$0xff]
    %v30 = vld [vmem:[%s28 + $0x18] sm:$0xff]
    %v31 = vmul.f32 %v23, 0.25670236
    %v32 = vmul.f32 %v24, 0.25670236
    %v33 = vmul.f32 %v26, 0.5037859
    %v34 = vmul.f32 %v27, 0.5037859
    %v35 = vadd.f32 %v31, %v33
    %v36 = vadd.f32 %v32, %v34
    %v37 = vmul.f32 %v29, 0.098335296
    %v38 = vmul.f32 %v30, 0.098335296
    %v39 = vadd.f32 %v35, %v37
    %v40 = vadd.f32 %v36, %v38
    %v41 = vadd.f32 %v39, 0.0627451
    %v42 = vadd.f32 %v40, 0.0627451
    %43 = vst [vmem:[#allocation5] sm:$0xff] %v41
    %44 = vst [vmem:[#allocation5 + $0x18] sm:$0xff] %v42
    %v45 = vmul.f32 %v23, -0.14827922
    %v46 = vmul.f32 %v24, -0.14827922
    %v47 = vmul.f32 %v26, -0.29093647
    %v48 = vmul.f32 %v27, -0.29093647
    %v49 = vadd.f32 %v45, %v47
    %v50 = vadd.f32 %v46, %v48
    %v51 = vmul.f32 %v29, 0.4392157
    %v52 = vmul.f32 %v30, 0.4392157
    %v53 = vadd.f32 %v49, %v51
    %v54 = vadd.f32 %v50, %v52
    %v55 = vadd.f32 %v53, 0.5019608
    %v56 = vadd.f32 %v54, 0.5019608
    %s57 = scalar_lea.vmem [#allocation5], 8
    %58 = vst [vmem:[%s57] sm:$0xff] %v55
    %59 = vst [vmem:[%s57 + $0x18] sm:$0xff] %v56
    %v60 = vmul.f32 %v23, 0.4392157
    %v61 = vmul.f32 %v24, 0.4392157
    %v62 = vmul.f32 %v26, -0.36753568
    %v63 = vmul.f32 %v27, -0.36753568
    %v64 = vadd.f32 %v60, %v62
    %v65 = vadd.f32 %v61, %v63
    %v66 = vmul.f32 %v29, -0.07168
    %v67 = vmul.f32 %v30, -0.07168
    %v68 = vadd.f32 %v64, %v66
    %v69 = vadd.f32 %v65, %v67
    %v70 = vadd.f32 %v68, 0.5019608
    %v71 = vadd.f32 %v69, 0.5019608
    %s72 = scalar_lea.vmem [#allocation5], 16
    %73 = vst [vmem:[%s72] sm:$0xff] %v70
    %74 = vst [vmem:[%s72 + $0x18] sm:$0xff] %v71
    // Predicated region
    $region10: #{tpu_custom_call.1} parent=1 // pred_check
      _
    $region11: #{tpu_custom_call.1} parent=1 // pred_check_branch
      %76 = sbr.rel (0) target = $region13
    $region12: #{tpu_custom_call.1} parent=1 // pred_region
      %s78 = ssub.s32 768, 768
      %79 = vsyncadd [#allocation4], %s78
      %s80 = sshll.u32 [#allocation5], 4
      %s81 = int_to_ptr.vmem [resolvable:$true] %s80
      %86 = dma.vmem_to_hbm [thread:$0]  %s81, 768, %s1, [#allocation4], 128, 128, 8
    $region13: #{tpu_custom_call.1} parent=1 // pred_fallthru
      _
    // Predicated region
    $region14: #{tpu_custom_call.1} parent=1 // pred_check
      _
    $region15: #{tpu_custom_call.1} parent=1 // pred_check_branch
      %88 = sbr.rel (0) target = $region17
    $region16: #{tpu_custom_call.1} parent=1 // pred_region
      %89 = dma.done [#allocation4], 768
    $region17: #{tpu_custom_call.1} parent=1 // pred_fallthru
      _
    %90 = vsyncpa [#allocation3], 1
    %91 = vsyncpa [#allocation4], 1

</llo_original>
